<compile_context>
chip_gen: v6e
topology: v6e:2x2x1
jax: 0.10.0
libtpu: 0.0.40
codegen_flags: <defaults>
</compile_context>

<pallas_src>
import jax
import jax.numpy as jnp
from jax.experimental import pallas as pl
from jax.experimental.pallas import tpu as pltpu


def _round_up(x, m):
    return ((x + m - 1) // m) * m


# ----------------------------------------------------------------------------
# Kernel: single streaming pass over samples, VPU pair-sum accumulation.
# ----------------------------------------------------------------------------
def _mixit_stats_kernel(est_ref, tgt_ref, gram_ref, cross_ref, tdiag_ref):
    """Accumulate E@E^T, E@T^T and diag(T@T^T) for one sample tile.

    grid = (batch, sample_split, sample_tile); outputs are resident across the
    innermost (arbitrary) sample-tile axis and re-initialized when it restarts.
    """
    t = pl.program_id(2)

    @pl.when(t == 0)
    def _init():
        gram_ref[...] = jnp.zeros_like(gram_ref)
        cross_ref[...] = jnp.zeros_like(cross_ref)
        tdiag_ref[...] = jnp.zeros_like(tdiag_ref)

    n_src = est_ref.shape[1]
    n_mix = tgt_ref.shape[1]

    e = est_ref[0]                      # (n_src, tile)
    g = tgt_ref[0]                      # (n_mix, tile)
    # Accumulate in f32 on the VPU (v5e has no bf16 VALU path); no-op for f32
    # inputs because the cast is skipped at trace time.
    if e.dtype != jnp.float32:
        e = e.astype(jnp.float32)
    if g.dtype != jnp.float32:
        g = g.astype(jnp.float32)

    # gram column j: broadcast source row j across sublanes, multiply against
    # all sources, reduce over the lane (sample) axis.  Pure VPU + one lane
    # reduction -- no MXU weight pushes, no cross-sublane shuffles.
    for j in range(n_src):
        ej = e[j:j + 1, :]                                          # (1, tile)
        gram_ref[0, 0, :, j:j + 1] += jnp.sum(e * ej, axis=-1, keepdims=True)

    # cross column m: broadcast mixture row m against all sources.
    for m in range(n_mix):
        gm = g[m:m + 1, :]                                          # (1, tile)
        cross_ref[0, 0, :, m:m + 1] += jnp.sum(e * gm, axis=-1, keepdims=True)

    # Only the diagonal of T T^T is needed downstream.
    tdiag_ref[0, 0] += jnp.sum(g * g, axis=-1, keepdims=True)       # (n_mix, 1)


def compute_mixit_stats(est, tgt, *, tile=65536, sample_splits=None):
    """One streaming HBM pass producing (gram, cross, tdiag).

    gram:  (B, n_src, n_src) = E E^T
    cross: (B, n_src, n_mix) = E T^T
    tdiag: (B, n_mix)        = diag(T T^T)

    The kernel covers whole lane-aligned sample tiles; the ragged tail (< one
    tile) is added with a tiny JAX einsum over the tail slice only (no full
    padded copies of the inputs are ever materialized).
    """
    B, n_src, T = est.shape
    B2, n_mix, T2 = tgt.shape
    assert (B2, T2) == (B, T), "est_targets / targets batch & sample axes must match"

    if sample_splits is None:
        # v7x has two TensorCores: give them a parallel axis even when B == 1.
        sample_splits = 2 if B == 1 else 1
    sample_splits = max(1, int(sample_splits))

    lanes_T = (T // 128) * 128
    eff = max(128, min(_round_up(int(tile), 128), lanes_T)) if lanes_T > 0 else 0
    n_full = (T // eff) if eff > 0 else 0
    if n_full < sample_splits:
        sample_splits = 1
    n_t = n_full // sample_splits
    kernel_T = sample_splits * n_t * eff

    if n_t > 0:
        # VMEM budget: both (sublane-padded) input blocks, double-buffered,
        # plus headroom.  Keeps large tiles from silently hitting the scoped
        # default (esp. v7x: 64 MiB physical, 32 MiB default scoped).
        blk_bytes = (_round_up(n_src, 8) + _round_up(n_mix, 8)) * eff * est.dtype.itemsize
        vmem_limit = int(min(64 << 20, max(4 * blk_bytes + (2 << 20), 32 << 20)))

        def sample_idx(b, p, t):
            return (b, 0, p * n_t + t)

        gram_p, cross_p, tdiag_p = pl.pallas_call(
            _mixit_stats_kernel,
            out_shape=(
                jax.ShapeDtypeStruct((B, sample_splits, n_src, n_src), jnp.float32),
                jax.ShapeDtypeStruct((B, sample_splits, n_src, n_mix), jnp.float32),
                jax.ShapeDtypeStruct((B, sample_splits, n_mix, 1), jnp.float32),
            ),
            grid_spec=pltpu.PrefetchScalarGridSpec(
                num_scalar_prefetch=0,
                grid=(B, sample_splits, n_t),
                in_specs=[
                    pl.BlockSpec((1, n_src, eff), sample_idx),
                    pl.BlockSpec((1, n_mix, eff), sample_idx),
                ],
                out_specs=[
                    pl.BlockSpec((1, 1, n_src, n_src), lambda b, p, t: (b, p, 0, 0)),
                    pl.BlockSpec((1, 1, n_src, n_mix), lambda b, p, t: (b, p, 0, 0)),
                    pl.BlockSpec((1, 1, n_mix, 1), lambda b, p, t: (b, p, 0, 0)),
                ],
            ),
            compiler_params=pltpu.CompilerParams(
                dimension_semantics=("parallel", "parallel", "arbitrary"),
                vmem_limit_bytes=vmem_limit,
            ),
        )(est, tgt)
        gram = jnp.sum(gram_p, axis=1)
        cross = jnp.sum(cross_p, axis=1)
        tdiag = jnp.sum(tdiag_p, axis=1)[..., 0]
    else:
        gram = jnp.zeros((B, n_src, n_src), jnp.float32)
        cross = jnp.zeros((B, n_src, n_mix), jnp.float32)
        tdiag = jnp.zeros((B, n_mix), jnp.float32)

    if kernel_T < T:
        # Ragged remainder (< one tile per batch): tiny JAX einsum on the tail
        # slice only -- reads just the tail bytes, never copies the full input.
        e_tail = est[:, :, kernel_T:].astype(jnp.float32)
        t_tail = tgt[:, :, kernel_T:].astype(jnp.float32)
        gram = gram + jnp.einsum('bst,but->bsu', e_tail, e_tail)
        cross = cross + jnp.einsum('bst,bmt->bsm', e_tail, t_tail)
        tdiag = tdiag + jnp.sum(t_tail * t_tail, axis=-1)

    return gram, cross, tdiag


# ----------------------------------------------------------------------------
# Wrapper: full EfficentMixITWrapper.forward (loss_func = MSE over samples)
# ----------------------------------------------------------------------------
def efficient_mixit_loss(est_targets, targets, *, tile=65536, sample_splits=None,
                         ridge=1e-6):
    """est_targets: (B, n_sources, n_samples), targets: (B, n_mixtures, n_samples)."""
    B, n_src, T = est_targets.shape

    gram, cross, tdiag = compute_mixit_stats(
        est_targets, targets, tile=tile, sample_splits=sample_splits)

    # --- find_best_perm_with_least_square ---
    # torch.linalg.lstsq(E^T, T^T) via (ridge-regularized) normal equations.
    # TODO(synk): true minimum-norm lstsq for rank-deficient E has no clean
    # Pallas equivalent; the tiny relative ridge keeps the solve finite and
    # does not perturb the argmax for well-conditioned inputs.
    diag_mean = jnp.mean(jnp.diagonal(gram, axis1=-2, axis2=-1), axis=-1)   # (B,)
    eye = jnp.eye(n_src, dtype=jnp.float32)
    A = jnp.linalg.solve(
        gram + (ridge * diag_mean)[:, None, None] * eye, cross)            # (B, n_src, n_mix)
    Amax = jnp.max(A, axis=-1, keepdims=True)
    perm = (A == Amax).astype(jnp.float32)      # matches torch's (A == Amax)
    P = jnp.swapaxes(perm, -1, -2)              # (B, n_mix, n_src)

    # --- einsum + loss_func (MSE over samples) + mean, recovered from stats ---
    #   SSE_m = ||P_m E - T_m||^2 = (P G P^T)_mm - 2 (P C)_mm + diag(T T^T)_m
    pgpt = jnp.einsum('bms,bst,bmt->bm', P, gram, P)          # (B, n_mix)
    pc = jnp.einsum('bms,bsm->bm', P, cross)                  # (B, n_mix)
    sse = jnp.maximum(pgpt - 2.0 * pc + tdiag, 0.0)           # clamp fp cancellation
    return jnp.mean(sse / jnp.float32(T))


# ----------------------------------------------------------------------------
# Pure-JAX reference (same semantics as the PyTorch module with MSE loss_func)
# ----------------------------------------------------------------------------
def reference_mixit_loss(est_targets, targets):
    gram = jnp.einsum('bst,but->bsu', est_targets, est_targets)
    cross = jnp.einsum('bst,bmt->bsm', est_targets, targets)
    A = jnp.linalg.solve(gram, cross)
    Amax = jnp.max(A, axis=-1, keepdims=True)
    perm = (A == Amax).astype(est_targets.dtype)
    perm_mat = jnp.swapaxes(perm, -1, -2)
    est_mix = jnp.einsum('bnm,bmt->bnt', perm_mat, est_targets)
    return jnp.mean(jnp.mean((est_mix - targets) ** 2, axis=-1))


if __name__ == "__main__":
    key = jax.random.PRNGKey(0)
    B, n_src, n_mix, T = 2, 4, 2, 6000   # ragged T exercises the JAX-tail path
    k1, k2 = jax.random.split(key)

    # Synthetic MixIT setup: 4 estimated sources, 2 mixtures formed from pairs.
    sources = jax.random.normal(k1, (B, n_src, T), jnp.float32)
    est_targets = sources + 0.1 * jax.random.normal(k2, (B, n_src, T), jnp.float32)
    targets = jnp.stack(
        [sources[:, 0] + sources[:, 1], sources[:, 2] + sources[:, 3]], axis=1
    )  # (B, n_mix, T)

    # Small tile at this T forces a multi-tile grid reduction + ragged tail;
    # sample_splits=2 also exercises the extra parallel (dual-TensorCore) axis.
    loss = jax.block_until_ready(
        efficient_mixit_loss(est_targets, targets, tile=512, sample_splits=2))
    ref = jax.block_until_ready(reference_mixit_loss(est_targets, targets))

    # Sanity-check the kernel statistics against plain-JAX einsums.
    gram, cross, tdiag = compute_mixit_stats(est_targets, targets, tile=512,
                                             sample_splits=2)
    gram_ref = jnp.einsum('bst,but->bsu', est_targets, est_targets)
    cross_ref = jnp.einsum('bst,bmt->bsm', est_targets, targets)
    tdiag_ref = jnp.einsum('bmt,bmt->bm', targets, targets)
    assert jnp.allclose(gram, gram_ref, rtol=1e-4, atol=1e-1), "gram mismatch"
    assert jnp.allclose(cross, cross_ref, rtol=1e-4, atol=1e-1), "cross mismatch"
    assert jnp.allclose(tdiag, tdiag_ref, rtol=1e-4, atol=1e-1), "tdiag mismatch"

    # Default split path (splits=1 for B=2), different tile size.
    loss2 = jax.block_until_ready(
        efficient_mixit_loss(est_targets, targets, tile=1024))

    assert jnp.isfinite(loss) and jnp.isfinite(loss2), "non-finite loss"
    # Loss derived algebraically from Gram/Cross (single HBM pass) vs. explicit
    # residual: agreement is limited by fp32 cancellation, hence the looser rtol.
    assert jnp.allclose(loss, ref, rtol=1e-2, atol=1e-5), (loss, ref)
    assert jnp.allclose(loss2, ref, rtol=1e-2, atol=1e-5), (loss2, ref)
    print("KERNEL_OK")
</pallas_src>

<mosaic_0001>
module attributes {stable_mosaic.version = 11 : i64} {
  func.func @_mixit_stats_kernel(%arg0: i32, %arg1: i32, %arg2: i32, %arg3: memref<1x4x512xf32, #tpu.memory_space<vmem>>, %arg4: memref<1x2x512xf32, #tpu.memory_space<vmem>>, %arg5: memref<1x1x4x4xf32, #tpu.memory_space<vmem>>, %arg6: memref<1x1x4x2xf32, #tpu.memory_space<vmem>>, %arg7: memref<1x1x2x1xf32, #tpu.memory_space<vmem>>) attributes {dimension_semantics = [#tpu.dimension_semantics<parallel>, #tpu.dimension_semantics<parallel>, #tpu.dimension_semantics<arbitrary>], iteration_bounds = array<i64: 2, 2, 5>, scalar_prefetch = 0 : i64, scratch_operands = 0 : i64, tpu.core_type = #tpu.core_type<tc>, window_params = [{transform_indices = @transform_0, window_bounds = array<i64: 1, 4, 512>}, {transform_indices = @transform_1, window_bounds = array<i64: 1, 2, 512>}, {transform_indices = @transform_2, window_bounds = array<i64: 1, 1, 4, 4>}, {transform_indices = @transform_3, window_bounds = array<i64: 1, 1, 4, 2>}, {transform_indices = @transform_4, window_bounds = array<i64: 1, 1, 2, 1>}]} {
    %c0_i32 = arith.constant 0 : i32
    %0 = arith.cmpi eq, %arg2, %c0_i32 : i32
    %1 = arith.extui %0 : i1 to i32
    %c0_i32_0 = arith.constant 0 : i32
    %2 = arith.cmpi ne, %1, %c0_i32_0 : i32
    scf.if %2 {
      %cst_65 = arith.constant 0.000000e+00 : f32
      %82 = vector.broadcast %cst_65 : f32 to vector<1x1x4x4xf32>
      %c0_66 = arith.constant 0 : index
      %c0_67 = arith.constant 0 : index
      %c0_68 = arith.constant 0 : index
      %c0_69 = arith.constant 0 : index
      %83 = vector.load %arg5[%c0_66, %c0_67, %c0_68, %c0_69] : memref<1x1x4x4xf32, #tpu.memory_space<vmem>>, vector<1x1x4x4xf32>
      tpu.vector_store %arg5[%c0_66, %c0_67, %c0_68, %c0_69], %82 {strides = array<i32>} : memref<1x1x4x4xf32, #tpu.memory_space<vmem>>, vector<1x1x4x4xf32>,
      %cst_70 = arith.constant 0.000000e+00 : f32
      %84 = vector.broadcast %cst_70 : f32 to vector<1x1x4x2xf32>
      %c0_71 = arith.constant 0 : index
      %c0_72 = arith.constant 0 : index
      %c0_73 = arith.constant 0 : index
      %c0_74 = arith.constant 0 : index
      %85 = vector.load %arg6[%c0_71, %c0_72, %c0_73, %c0_74] : memref<1x1x4x2xf32, #tpu.memory_space<vmem>>, vector<1x1x4x2xf32>
      tpu.vector_store %arg6[%c0_71, %c0_72, %c0_73, %c0_74], %84 {strides = array<i32>} : memref<1x1x4x2xf32, #tpu.memory_space<vmem>>, vector<1x1x4x2xf32>,
      %cst_75 = arith.constant 0.000000e+00 : f32
      %86 = vector.broadcast %cst_75 : f32 to vector<1x1x2x1xf32>
      %c0_76 = arith.constant 0 : index
      %c0_77 = arith.constant 0 : index
      %c0_78 = arith.constant 0 : index
      %c0_79 = arith.constant 0 : index
      %87 = vector.load %arg7[%c0_76, %c0_77, %c0_78, %c0_79] : memref<1x1x2x1xf32, #tpu.memory_space<vmem>>, vector<1x1x2x1xf32>
      tpu.vector_store %arg7[%c0_76, %c0_77, %c0_78, %c0_79], %86 {strides = array<i32>} : memref<1x1x2x1xf32, #tpu.memory_space<vmem>>, vector<1x1x2x1xf32>,
    } else {
    }
    %c0 = arith.constant 0 : index
    %c0_1 = arith.constant 0 : index
    %c0_2 = arith.constant 0 : index
    %3 = vector.load %arg3[%c0, %c0_1, %c0_2] : memref<1x4x512xf32, #tpu.memory_space<vmem>>, vector<1x4x512xf32>
    %4 = vector.shape_cast %3 : vector<1x4x512xf32> to vector<4x512xf32>
    %c0_3 = arith.constant 0 : index
    %c0_4 = arith.constant 0 : index
    %c0_5 = arith.constant 0 : index
    %5 = vector.load %arg4[%c0_3, %c0_4, %c0_5] : memref<1x2x512xf32, #tpu.memory_space<vmem>>, vector<1x2x512xf32>
    %6 = vector.shape_cast %5 : vector<1x2x512xf32> to vector<2x512xf32>
    %7 = vector.extract_strided_slice %4 {offsets = [0, 0], sizes = [1, 512], strides = [1, 1]} : vector<4x512xf32> to vector<1x512xf32>
    %c0_6 = arith.constant 0 : index
    %c0_7 = arith.constant 0 : index
    %c0_8 = arith.constant 0 : index
    %c0_9 = arith.constant 0 : index
    %8 = vector.load %arg5[%c0_6, %c0_7, %c0_8, %c0_9] : memref<1x1x4x4xf32, #tpu.memory_space<vmem>>, vector<1x1x4x1xf32>
    %9 = vector.shape_cast %8 : vector<1x1x4x1xf32> to vector<4x1xf32>
    %10 = vector.broadcast %7 : vector<1x512xf32> to vector<4x512xf32>
    %11 = arith.mulf %4, %10 : vector<4x512xf32>
    %cst = arith.constant dense<0.000000e+00> : vector<4xf32>
    %12 = vector.multi_reduction <add>, %11, %cst [1] : vector<4x512xf32> to vector<4xf32>
    %13 = vector.shape_cast %12 : vector<4xf32> to vector<4x1xf32>
    %14 = arith.addf %9, %13 : vector<4x1xf32>
    %c0_10 = arith.constant 0 : index
    %c0_11 = arith.constant 0 : index
    %c0_12 = arith.constant 0 : index
    %c0_13 = arith.constant 0 : index
    %15 = vector.load %arg5[%c0_10, %c0_11, %c0_12, %c0_13] : memref<1x1x4x4xf32, #tpu.memory_space<vmem>>, vector<1x1x4x1xf32>
    %16 = vector.shape_cast %15 : vector<1x1x4x1xf32> to vector<4x1xf32>
    %17 = vector.shape_cast %14 : vector<4x1xf32> to vector<1x1x4x1xf32>
    tpu.vector_store %arg5[%c0_10, %c0_11, %c0_12, %c0_13], %17 {strides = array<i32>} : memref<1x1x4x4xf32, #tpu.memory_space<vmem>>, vector<1x1x4x1xf32>,
    %18 = vector.extract_strided_slice %4 {offsets = [1, 0], sizes = [1, 512], strides = [1, 1]} : vector<4x512xf32> to vector<1x512xf32>
    %c0_14 = arith.constant 0 : index
    %c0_15 = arith.constant 0 : index
    %c0_16 = arith.constant 0 : index
    %c1 = arith.constant 1 : index
    %19 = vector.load %arg5[%c0_14, %c0_15, %c0_16, %c1] : memref<1x1x4x4xf32, #tpu.memory_space<vmem>>, vector<1x1x4x1xf32>
    %20 = vector.shape_cast %19 : vector<1x1x4x1xf32> to vector<4x1xf32>
    %21 = vector.broadcast %18 : vector<1x512xf32> to vector<4x512xf32>
    %22 = arith.mulf %4, %21 : vector<4x512xf32>
    %cst_17 = arith.constant dense<0.000000e+00> : vector<4xf32>
    %23 = vector.multi_reduction <add>, %22, %cst_17 [1] : vector<4x512xf32> to vector<4xf32>
    %24 = vector.shape_cast %23 : vector<4xf32> to vector<4x1xf32>
    %25 = arith.addf %20, %24 : vector<4x1xf32>
    %c0_18 = arith.constant 0 : index
    %c0_19 = arith.constant 0 : index
    %c0_20 = arith.constant 0 : index
    %c1_21 = arith.constant 1 : index
    %26 = vector.load %arg5[%c0_18, %c0_19, %c0_20, %c1_21] : memref<1x1x4x4xf32, #tpu.memory_space<vmem>>, vector<1x1x4x1xf32>
    %27 = vector.shape_cast %26 : vector<1x1x4x1xf32> to vector<4x1xf32>
    %28 = vector.shape_cast %25 : vector<4x1xf32> to vector<1x1x4x1xf32>
    tpu.vector_store %arg5[%c0_18, %c0_19, %c0_20, %c1_21], %28 {strides = array<i32>} : memref<1x1x4x4xf32, #tpu.memory_space<vmem>>, vector<1x1x4x1xf32>,
    %29 = vector.extract_strided_slice %4 {offsets = [2, 0], sizes = [1, 512], strides = [1, 1]} : vector<4x512xf32> to vector<1x512xf32>
    %c0_22 = arith.constant 0 : index
    %c0_23 = arith.constant 0 : index
    %c0_24 = arith.constant 0 : index
    %c2 = arith.constant 2 : index
    %30 = vector.load %arg5[%c0_22, %c0_23, %c0_24, %c2] : memref<1x1x4x4xf32, #tpu.memory_space<vmem>>, vector<1x1x4x1xf32>
    %31 = vector.shape_cast %30 : vector<1x1x4x1xf32> to vector<4x1xf32>
    %32 = vector.broadcast %29 : vector<1x512xf32> to vector<4x512xf32>
    %33 = arith.mulf %4, %32 : vector<4x512xf32>
    %cst_25 = arith.constant dense<0.000000e+00> : vector<4xf32>
    %34 = vector.multi_reduction <add>, %33, %cst_25 [1] : vector<4x512xf32> to vector<4xf32>
    %35 = vector.shape_cast %34 : vector<4xf32> to vector<4x1xf32>
    %36 = arith.addf %31, %35 : vector<4x1xf32>
    %c0_26 = arith.constant 0 : index
    %c0_27 = arith.constant 0 : index
    %c0_28 = arith.constant 0 : index
    %c2_29 = arith.constant 2 : index
    %37 = vector.load %arg5[%c0_26, %c0_27, %c0_28, %c2_29] : memref<1x1x4x4xf32, #tpu.memory_space<vmem>>, vector<1x1x4x1xf32>
    %38 = vector.shape_cast %37 : vector<1x1x4x1xf32> to vector<4x1xf32>
    %39 = vector.shape_cast %36 : vector<4x1xf32> to vector<1x1x4x1xf32>
    tpu.vector_store %arg5[%c0_26, %c0_27, %c0_28, %c2_29], %39 {strides = array<i32>} : memref<1x1x4x4xf32, #tpu.memory_space<vmem>>, vector<1x1x4x1xf32>,
    %40 = vector.extract_strided_slice %4 {offsets = [3, 0], sizes = [1, 512], strides = [1, 1]} : vector<4x512xf32> to vector<1x512xf32>
    %c0_30 = arith.constant 0 : index
    %c0_31 = arith.constant 0 : index
    %c0_32 = arith.constant 0 : index
    %c3 = arith.constant 3 : index
    %41 = vector.load %arg5[%c0_30, %c0_31, %c0_32, %c3] : memref<1x1x4x4xf32, #tpu.memory_space<vmem>>, vector<1x1x4x1xf32>
    %42 = vector.shape_cast %41 : vector<1x1x4x1xf32> to vector<4x1xf32>
    %43 = vector.broadcast %40 : vector<1x512xf32> to vector<4x512xf32>
    %44 = arith.mulf %4, %43 : vector<4x512xf32>
    %cst_33 = arith.constant dense<0.000000e+00> : vector<4xf32>
    %45 = vector.multi_reduction <add>, %44, %cst_33 [1] : vector<4x512xf32> to vector<4xf32>
    %46 = vector.shape_cast %45 : vector<4xf32> to vector<4x1xf32>
    %47 = arith.addf %42, %46 : vector<4x1xf32>
    %c0_34 = arith.constant 0 : index
    %c0_35 = arith.constant 0 : index
    %c0_36 = arith.constant 0 : index
    %c3_37 = arith.constant 3 : index
    %48 = vector.load %arg5[%c0_34, %c0_35, %c0_36, %c3_37] : memref<1x1x4x4xf32, #tpu.memory_space<vmem>>, vector<1x1x4x1xf32>
    %49 = vector.shape_cast %48 : vector<1x1x4x1xf32> to vector<4x1xf32>
    %50 = vector.shape_cast %47 : vector<4x1xf32> to vector<1x1x4x1xf32>
    tpu.vector_store %arg5[%c0_34, %c0_35, %c0_36, %c3_37], %50 {strides = array<i32>} : memref<1x1x4x4xf32, #tpu.memory_space<vmem>>, vector<1x1x4x1xf32>,
    %51 = vector.extract_strided_slice %6 {offsets = [0, 0], sizes = [1, 512], strides = [1, 1]} : vector<2x512xf32> to vector<1x512xf32>
    %c0_38 = arith.constant 0 : index
    %c0_39 = arith.constant 0 : index
    %c0_40 = arith.constant 0 : index
    %c0_41 = arith.constant 0 : index
    %52 = vector.load %arg6[%c0_38, %c0_39, %c0_40, %c0_41] : memref<1x1x4x2xf32, #tpu.memory_space<vmem>>, vector<1x1x4x1xf32>
    %53 = vector.shape_cast %52 : vector<1x1x4x1xf32> to vector<4x1xf32>
    %54 = vector.broadcast %51 : vector<1x512xf32> to vector<4x512xf32>
    %55 = arith.mulf %4, %54 : vector<4x512xf32>
    %cst_42 = arith.constant dense<0.000000e+00> : vector<4xf32>
    %56 = vector.multi_reduction <add>, %55, %cst_42 [1] : vector<4x512xf32> to vector<4xf32>
    %57 = vector.shape_cast %56 : vector<4xf32> to vector<4x1xf32>
    %58 = arith.addf %53, %57 : vector<4x1xf32>
    %c0_43 = arith.constant 0 : index
    %c0_44 = arith.constant 0 : index
    %c0_45 = arith.constant 0 : index
    %c0_46 = arith.constant 0 : index
    %59 = vector.load %arg6[%c0_43, %c0_44, %c0_45, %c0_46] : memref<1x1x4x2xf32, #tpu.memory_space<vmem>>, vector<1x1x4x1xf32>
    %60 = vector.shape_cast %59 : vector<1x1x4x1xf32> to vector<4x1xf32>
    %61 = vector.shape_cast %58 : vector<4x1xf32> to vector<1x1x4x1xf32>
    tpu.vector_store %arg6[%c0_43, %c0_44, %c0_45, %c0_46], %61 {strides = array<i32>} : memref<1x1x4x2xf32, #tpu.memory_space<vmem>>, vector<1x1x4x1xf32>,
    %62 = vector.extract_strided_slice %6 {offsets = [1, 0], sizes = [1, 512], strides = [1, 1]} : vector<2x512xf32> to vector<1x512xf32>
    %c0_47 = arith.constant 0 : index
    %c0_48 = arith.constant 0 : index
    %c0_49 = arith.constant 0 : index
    %c1_50 = arith.constant 1 : index
    %63 = vector.load %arg6[%c0_47, %c0_48, %c0_49, %c1_50] : memref<1x1x4x2xf32, #tpu.memory_space<vmem>>, vector<1x1x4x1xf32>
    %64 = vector.shape_cast %63 : vector<1x1x4x1xf32> to vector<4x1xf32>
    %65 = vector.broadcast %62 : vector<1x512xf32> to vector<4x512xf32>
    %66 = arith.mulf %4, %65 : vector<4x512xf32>
    %cst_51 = arith.constant dense<0.000000e+00> : vector<4xf32>
    %67 = vector.multi_reduction <add>, %66, %cst_51 [1] : vector<4x512xf32> to vector<4xf32>
    %68 = vector.shape_cast %67 : vector<4xf32> to vector<4x1xf32>
    %69 = arith.addf %64, %68 : vector<4x1xf32>
    %c0_52 = arith.constant 0 : index
    %c0_53 = arith.constant 0 : index
    %c0_54 = arith.constant 0 : index
    %c1_55 = arith.constant 1 : index
    %70 = vector.load %arg6[%c0_52, %c0_53, %c0_54, %c1_55] : memref<1x1x4x2xf32, #tpu.memory_space<vmem>>, vector<1x1x4x1xf32>
    %71 = vector.shape_cast %70 : vector<1x1x4x1xf32> to vector<4x1xf32>
    %72 = vector.shape_cast %69 : vector<4x1xf32> to vector<1x1x4x1xf32>
    tpu.vector_store %arg6[%c0_52, %c0_53, %c0_54, %c1_55], %72 {strides = array<i32>} : memref<1x1x4x2xf32, #tpu.memory_space<vmem>>, vector<1x1x4x1xf32>,
    %c0_56 = arith.constant 0 : index
    %c0_57 = arith.constant 0 : index
    %c0_58 = arith.constant 0 : index
    %c0_59 = arith.constant 0 : index
    %73 = vector.load %arg7[%c0_56, %c0_57, %c0_58, %c0_59] : memref<1x1x2x1xf32, #tpu.memory_space<vmem>>, vector<1x1x2x1xf32>
    %74 = vector.shape_cast %73 : vector<1x1x2x1xf32> to vector<2x1xf32>
    %75 = arith.mulf %6, %6 : vector<2x512xf32>
    %cst_60 = arith.constant dense<0.000000e+00> : vector<2xf32>
    %76 = vector.multi_reduction <add>, %75, %cst_60 [1] : vector<2x512xf32> to vector<2xf32>
    %77 = vector.shape_cast %76 : vector<2xf32> to vector<2x1xf32>
    %78 = arith.addf %74, %77 : vector<2x1xf32>
    %c0_61 = arith.constant 0 : index
    %c0_62 = arith.constant 0 : index
    %c0_63 = arith.constant 0 : index
    %c0_64 = arith.constant 0 : index
    %79 = vector.load %arg7[%c0_61, %c0_62, %c0_63, %c0_64] : memref<1x1x2x1xf32, #tpu.memory_space<vmem>>, vector<1x1x2x1xf32>
    %80 = vector.shape_cast %79 : vector<1x1x2x1xf32> to vector<2x1xf32>
    %81 = vector.shape_cast %78 : vector<2x1xf32> to vector<1x1x2x1xf32>
    tpu.vector_store %arg7[%c0_61, %c0_62, %c0_63, %c0_64], %81 {strides = array<i32>} : memref<1x1x2x1xf32, #tpu.memory_space<vmem>>, vector<1x1x2x1xf32>,
    return
  }
  func.func @transform_0(%arg0: i32, %arg1: i32, %arg2: i32) -> (i32, i32, i32) {
    %c5_i32 = arith.constant 5 : i32
    %0 = arith.muli %arg1, %c5_i32 : i32
    %1 = arith.addi %0, %arg2 : i32
    %c0_i32 = arith.constant 0 : i32
    %c0_i32_0 = arith.constant 0 : i32
    return %arg0, %c0_i32, %1 : i32, i32, i32
  }
  func.func @transform_1(%arg0: i32, %arg1: i32, %arg2: i32) -> (i32, i32, i32) {
    %c5_i32 = arith.constant 5 : i32
    %0 = arith.muli %arg1, %c5_i32 : i32
    %1 = arith.addi %0, %arg2 : i32
    %c0_i32 = arith.constant 0 : i32
    %c0_i32_0 = arith.constant 0 : i32
    return %arg0, %c0_i32, %1 : i32, i32, i32
  }
  func.func @transform_2(%arg0: i32, %arg1: i32, %arg2: i32) -> (i32, i32, i32, i32) {
    %c0_i32 = arith.constant 0 : i32
    %c0_i32_0 = arith.constant 0 : i32
    %c0_i32_1 = arith.constant 0 : i32
    return %arg0, %arg1, %c0_i32, %c0_i32_0 : i32, i32, i32, i32
  }
  func.func @transform_3(%arg0: i32, %arg1: i32, %arg2: i32) -> (i32, i32, i32, i32) {
    %c0_i32 = arith.constant 0 : i32
    %c0_i32_0 = arith.constant 0 : i32
    %c0_i32_1 = arith.constant 0 : i32
    return %arg0, %arg1, %c0_i32, %c0_i32_0 : i32, i32, i32, i32
  }
  func.func @transform_4(%arg0: i32, %arg1: i32, %arg2: i32) -> (i32, i32, i32, i32) {
    %c0_i32 = arith.constant 0 : i32
    %c0_i32_0 = arith.constant 0 : i32
    %c0_i32_1 = arith.constant 0 : i32
    return %arg0, %arg1, %c0_i32, %c0_i32_0 : i32, i32, i32, i32
  }
}

</mosaic_0001>

<llo_original>
// kernel: tpu_custom_call.1
$region0: #{tpu_custom_call.1}
  #allocation0 [shape = 'u32[]', space=smem, size = 0x4, offset = 0x4, fixed_abs, tag = 'smem constant byte address 0x4 - core index']
  #allocation1 [shape = 'u32[144,128]{1,0:T(1,128)}', space=vmem, size = 0x12000, scoped, tag = 'internal scratch']
  %s0 = inlined_call_operand.hbm [shape: f32[2,4,6000], index: 0, kind: input, shape index: {}]
  %s1 = inlined_call_operand.hbm [shape: f32[2,2,6000], index: 1, kind: input, shape index: {}]
  %s2 = inlined_call_operand.hbm [shape: f32[2,2,4,4], index: 2, kind: output, shape index: {0}]
  %s3 = inlined_call_operand.vmem [shape: f32[2,2,4,2], index: 3, kind: output, shape index: {1}]
  %s4 = inlined_call_operand.vmem [shape: f32[2,2,2,1], index: 4, kind: output, shape index: {2}]
  %5 = xla_tuple %s2, %s3, %s4
  %s6 = sld [smem:[#allocation0]]
  $region69: #{tpu_custom_call.1} parent=0
    _
  %s8 = ssub.s32 1, %s6
  %s9 = scalar_select 0, %s8, %s6
  $region1: #{tpu_custom_call.1} parent=0
    #allocation2 [shape = 'u8[16384]{0}', space=vmem, size = 0x4000, scoped, tag = 'input window, operand 0']
    #allocation3 [shape = 's32[2]{0}', space=sflag, size = 0x8, scoped, tag = 'scoped memory for tpu_custom_call.1']
    #allocation4 [shape = 's32[2]{0}', space=sflag, size = 0x8, scoped, tag = 'scoped memory for tpu_custom_call.1']
    #allocation5 [shape = 'u8[8192]{0}', space=vmem, size = 0x2000, scoped, tag = 'input window, operand 1']
    #allocation6 [shape = 's32[2]{0}', space=sflag, size = 0x8, scoped, tag = 'scoped memory for tpu_custom_call.1']
    #allocation7 [shape = 'u8[4096]{0}', space=vmem, size = 0x1000, scoped, tag = 'output window, operand 0']
    %10 = vsyncpa [#allocation3], 0
    %s11 = scalar_lea.sflag [#allocation3], 1
    %12 = vsyncpa %s11, 0
    %13 = vsyncpa [#allocation6], 0
    %s14 = scalar_lea.sflag [#allocation6], 1
    %15 = vsyncpa %s14, 0
    %16 = vsyncpa [#allocation4], 0
    %s17 = scalar_lea.sflag [#allocation4], 1
    %18 = vsyncpa %s17, 0
    loop: start=0, step=1, limit=22
    $region2: #{tpu_custom_call.1} parent=1 // loop_pre_header
      _
    $region3: #{tpu_custom_call.1} parent=1 // loop_header
      %s20 = sphi 0, %s24
      %p21 = scmp.ge.s32.totalorder %s20, 22
      %s27 = sphi 0, %s46
      %s28 = sphi 0, %s42
      %s29 = sphi 0, %s38
      %s30 = sphi 0, %s27
      %s31 = sphi 0, %s28
      %s32 = sphi 0, %s29
      %s33 = sphi 0, %s30
      %s34 = sphi 0, %s31
      %s35 = sphi 0, %s32
      %s55 = sphi 0, %s57
      %s58 = sphi 0, %s55
      %s59 = sphi 0, %s58
      %s75 = sphi 0, %s59
      %s87 = sphi 0, %s89
      %s90 = sphi 0, %s87
      %s91 = sphi 0, %s90
      %s107 = sphi 0, %s91
      %s115 = sphi 0, %s117
      %s118 = sphi 0, %s115
      %s119 = sphi 0, %s118
      %s135 = sphi 0, %s119
      %s143 = sphi 0, %s145
      %s146 = sphi 0, %s143
      %s147 = sphi 0, %s146
      %s163 = sphi 0, %s147
      %s171 = sphi 0, %s173
      %s174 = sphi 0, %s171
      %s175 = sphi 0, %s174
      %s191 = sphi 0, %s175
    $region4: #{tpu_custom_call.1} parent=1 // loop_header_branch
      %23 = sbr.rel (%p21) target = $region8
    $region5: #{tpu_custom_call.1} parent=1 // loop_body
      %s25 = ssub.s32 %s20, 1
      %s26 = ssub.s32 %s20, 2
      %s36 = sadd.s32 1, %s29
      %p37 = scmp.ge.s32.totalorder %s36, 5
      %s38 = scalar_select %p37, 0, %s36
      %s39 = sadd.s32 1, %s28
      %s40 = scalar_select %p37, %s39, %s28
      %p41 = scmp.ge.s32.totalorder %s40, 2
      %s42 = scalar_select %p41, 0, %s40
      %s43 = sadd.s32 1, %s27
      %s44 = scalar_select %p41, %s43, %s27
      %p45 = scmp.ge.s32.totalorder %s44, 2
      %s46 = scalar_select %p45, 0, %s44
      %s47 = smul.u32 %s28, 5
      %s48 = sadd.s32 %s47, %s29
      %s49 = smul.u32 %s42, 5
      %s50 = sadd.s32 %s49, %s38
      %s51 = ssub.s32 %s27, %s46
      %s52 = ssub.s32 %s48, %s50
      %s53 = sor.u32 %s51, %s52
      %p54 = scmp.eq.s32.totalorder %s53, 0
      %s56 = sadd.s32 %s55, 1
      %s57 = scalar_select %p54, %s55, %s56
      %p60 = pneg %p54
      %p61 = scmp.eq.s32.totalorder %s20, 19
      %p62 = por %p60, %p61
      %p63 = scmp.ne.s32.totalorder %s55, %s58
      %p64 = scmp.eq.s32.totalorder %s20, 0
      %p65 = por %p63, %p64
      %p66 = scmp.ne.s32.totalorder %s55, %s58
      %p67 = scmp.eq.s32.totalorder %s25, 19
      %p68 = por %p66, %p67
      %p69 = scmp.ne.s32.totalorder %s58, %s59
      %p70 = scmp.eq.s32.totalorder %s25, 0
      %p71 = por %p69, %p70
      %p72 = scmp.ne.s32.totalorder %s58, %s59
      %p73 = scmp.eq.s32.totalorder %s26, 19
      %p74 = por %p72, %p73
      %p76 = scmp.ne.s32.totalorder %s59, %s75
      %p77 = scmp.eq.s32.totalorder %s26, 0
      %p78 = por %p76, %p77
      %s79 = smul.u32 %s28, 5
      %s80 = sadd.s32 %s79, %s29
      %s81 = smul.u32 %s42, 5
      %s82 = sadd.s32 %s81, %s38
      %s83 = ssub.s32 %s27, %s46
      %s84 = ssub.s32 %s80, %s82
      %s85 = sor.u32 %s83, %s84
      %p86 = scmp.eq.s32.totalorder %s85, 0
      %s88 = sadd.s32 %s87, 1
      %s89 = scalar_select %p86, %s87, %s88
      %p92 = pneg %p86
      %p93 = scmp.eq.s32.totalorder %s20, 19
      %p94 = por %p92, %p93
      %p95 = scmp.ne.s32.totalorder %s87, %s90
      %p96 = scmp.eq.s32.totalorder %s20, 0
      %p97 = por %p95, %p96
      %p98 = scmp.ne.s32.totalorder %s87, %s90
      %p99 = scmp.eq.s32.totalorder %s25, 19
      %p100 = por %p98, %p99
      %p101 = scmp.ne.s32.totalorder %s90, %s91
      %p102 = scmp.eq.s32.totalorder %s25, 0
      %p103 = por %p101, %p102
      %p104 = scmp.ne.s32.totalorder %s90, %s91
      %p105 = scmp.eq.s32.totalorder %s26, 19
      %p106 = por %p104, %p105
      %p108 = scmp.ne.s32.totalorder %s91, %s107
      %p109 = scmp.eq.s32.totalorder %s26, 0
      %p110 = por %p108, %p109
      %s111 = ssub.s32 %s27, %s46
      %s112 = ssub.s32 %s28, %s42
      %s113 = sor.u32 %s111, %s112
      %p114 = scmp.eq.s32.totalorder %s113, 0
      %s116 = sadd.s32 %s115, 1
      %s117 = scalar_select %p114, %s115, %s116
      %p120 = pneg %p114
      %p121 = scmp.eq.s32.totalorder %s20, 19
      %p122 = por %p120, %p121
      %p123 = scmp.ne.s32.totalorder %s115, %s118
      %p124 = scmp.eq.s32.totalorder %s20, 0
      %p125 = por %p123, %p124
      %p126 = scmp.ne.s32.totalorder %s115, %s118
      %p127 = scmp.eq.s32.totalorder %s25, 19
      %p128 = por %p126, %p127
      %p129 = scmp.ne.s32.totalorder %s118, %s119
      %p130 = scmp.eq.s32.totalorder %s25, 0
      %p131 = por %p129, %p130
      %p132 = scmp.ne.s32.totalorder %s118, %s119
      %p133 = scmp.eq.s32.totalorder %s26, 19
      %p134 = por %p132, %p133
      %p136 = scmp.ne.s32.totalorder %s119, %s135
      %p137 = scmp.eq.s32.totalorder %s26, 0
      %p138 = por %p136, %p137
      %s139 = ssub.s32 %s27, %s46
      %s140 = ssub.s32 %s28, %s42
      %s141 = sor.u32 %s139, %s140
      %p142 = scmp.eq.s32.totalorder %s141, 0
      %s144 = sadd.s32 %s143, 1
      %s145 = scalar_select %p142, %s143, %s144
      %p148 = pneg %p142
      %p149 = scmp.eq.s32.totalorder %s20, 19
      %p150 = por %p148, %p149
      %p151 = scmp.ne.s32.totalorder %s143, %s146
      %p152 = scmp.eq.s32.totalorder %s20, 0
      %p153 = por %p151, %p152
      %p154 = scmp.ne.s32.totalorder %s143, %s146
      %p155 = scmp.eq.s32.totalorder %s25, 19
      %p156 = por %p154, %p155
      %p157 = scmp.ne.s32.totalorder %s146, %s147
      %p158 = scmp.eq.s32.totalorder %s25, 0
      %p159 = por %p157, %p158
      %p160 = scmp.ne.s32.totalorder %s146, %s147
      %p161 = scmp.eq.s32.totalorder %s26, 19
      %p162 = por %p160, %p161
      %p164 = scmp.ne.s32.totalorder %s147, %s163
      %p165 = scmp.eq.s32.totalorder %s26, 0
      %p166 = por %p164, %p165
      %s167 = ssub.s32 %s27, %s46
      %s168 = ssub.s32 %s28, %s42
      %s169 = sor.u32 %s167, %s168
      %p170 = scmp.eq.s32.totalorder %s169, 0
      %s172 = sadd.s32 %s171, 1
      %s173 = scalar_select %p170, %s171, %s172
      %p176 = pneg %p170
      %p177 = scmp.eq.s32.totalorder %s20, 19
      %p178 = por %p176, %p177
      %p179 = scmp.ne.s32.totalorder %s171, %s174
      %p180 = scmp.eq.s32.totalorder %s20, 0
      %p181 = por %p179, %p180
      %p182 = scmp.ne.s32.totalorder %s171, %s174
      %p183 = scmp.eq.s32.totalorder %s25, 19
      %p184 = por %p182, %p183
      %p185 = scmp.ne.s32.totalorder %s174, %s175
      %p186 = scmp.eq.s32.totalorder %s25, 0
      %p187 = por %p185, %p186
      %p188 = scmp.ne.s32.totalorder %s174, %s175
      %p189 = scmp.eq.s32.totalorder %s26, 19
      %p190 = por %p188, %p189
      %p192 = scmp.ne.s32.totalorder %s175, %s191
      %p193 = scmp.eq.s32.totalorder %s26, 0
      %p194 = por %p192, %p193
      %p195 = scmp.le.s32.totalorder 1, %s20
      %p196 = scmp.lt.s32.totalorder %s20, 21
      %p197 = pnand %p195, %p196
      %p198 = pneg %p197
      // Predicated region
      $region9: #{tpu_custom_call.1} parent=5 // pred_check
        _
      $region10: #{tpu_custom_call.1} parent=5 // pred_check_branch
        %200 = sbr.rel (%p197) target = $region12
      $region11: #{tpu_custom_call.1} parent=5 // pred_region
        %s201 = ssub.s32 %s20, 1
      $region12: #{tpu_custom_call.1} parent=5 // pred_fallthru
        _
      %p202 = scmp.lt.s32.totalorder %s20, 20
      // Predicated region
      $region13: #{tpu_custom_call.1} parent=5 // pred_check
        %p203 = pneg %p202
      $region14: #{tpu_custom_call.1} parent=5 // pred_check_branch
        %205 = sbr.rel (%p203) target = $region16
      $region15: #{tpu_custom_call.1} parent=5 // pred_region
        // Predicated region
        $region17: #{tpu_custom_call.1} parent=15 // pred_check
          %p206 = pneg %p65
        $region18: #{tpu_custom_call.1} parent=15 // pred_check_branch
          %208 = sbr.rel (%p206) target = $region20
        $region19: #{tpu_custom_call.1} parent=15 // pred_region
          %s209 = sand.u32 %s55, 1
          %s210 = scalar_lea.sflag [#allocation3], %s209
          %s211 = sand.u32 %s55, 1
          %s212 = smul.addr %s211, 16
          %s213 = scalar_lea.vmem [#allocation2], %s212
          %s214 = smul.u32 %s28, 5
          %s215 = sadd.s32 %s214, %s29
          %s216 = smul.u32 4, %s215
          %s217 = ssub.s32 47, %s216
          %p218 = scmp.lt.s32.totalorder %s217, 4
          %s219 = scalar_select %p218, %s217, 4
          %s220 = smul.u32 64, %s219
          %s222 = ssub.s32 256, %s220
          %223 = vsyncadd %s210, %s222
          %p224 = scmp.ne.s32.totalorder 0, %s220
          %s225 = smul.addr %s27, 47
          %s226 = sadd.s32 %s216, %s225
          %s227 = smul.addr %s226, 64
          %s228 = scalar_lea.hbm %s0, %s227
          %s229 = smul.u32 %s219, 4
          %s230 = sshll.u32 %s229, 4
          %s231 = sshll.u32 %s213, 4
          %s232 = int_to_ptr.vmem [resolvable:$true] %s231
          %234 = dma.hbm_to_vmem [thread:$0]  (%p224), %s228, %s230, %s232, %s210
        $region20: #{tpu_custom_call.1} parent=15 // pred_fallthru
          _
        // Predicated region
        $region21: #{tpu_custom_call.1} parent=15 // pred_check
          %p235 = pneg %p97
        $region22: #{tpu_custom_call.1} parent=15 // pred_check_branch
          %237 = sbr.rel (%p235) target = $region24
        $region23: #{tpu_custom_call.1} parent=15 // pred_region
          %s238 = sand.u32 %s87, 1
          %s239 = scalar_lea.sflag [#allocation6], %s238
          %s240 = sand.u32 %s87, 1
          %s241 = smul.addr %s240, 8
          %s242 = scalar_lea.vmem [#allocation5], %s241
          %s243 = smul.u32 %s28, 5
          %s244 = sadd.s32 %s243, %s29
          %s245 = smul.u32 4, %s244
          %s246 = ssub.s32 47, %s245
          %p247 = scmp.lt.s32.totalorder %s246, 4
          %s248 = scalar_select %p247, %s246, 4
          %s249 = smul.u32 32, %s248
          %s251 = ssub.s32 128, %s249
          %252 = vsyncadd %s239, %s251
          %p253 = scmp.ne.s32.totalorder 0, %s249
          %s254 = smul.addr %s27, 47
          %s255 = sadd.s32 %s245, %s254
          %s256 = smul.addr %s255, 32
          %s257 = scalar_lea.hbm %s1, %s256
          %s258 = smul.u32 %s248, 2
          %s259 = sshll.u32 %s258, 4
          %s260 = sshll.u32 %s242, 4
          %s261 = int_to_ptr.vmem [resolvable:$true] %s260
          %263 = dma.hbm_to_vmem [thread:$0]  (%p253), %s257, %s259, %s261, %s239
        $region24: #{tpu_custom_call.1} parent=15 // pred_fallthru
          _
      $region16: #{tpu_custom_call.1} parent=5 // pred_fallthru
        _
      %p264 = scmp.le.s32.totalorder 1, %s20
      %p265 = scmp.lt.s32.totalorder %s20, 21
      %p266 = pnand %p264, %p265
      %p267 = pneg %p266
      // Predicated region
      $region25: #{tpu_custom_call.1} parent=5 // pred_check
        _
      $region26: #{tpu_custom_call.1} parent=5 // pred_check_branch
        %269 = sbr.rel (%p266) target = $region28
      $region27: #{tpu_custom_call.1} parent=5 // pred_region
        %s270 = ssub.s32 %s20, 1
        %s271 = sand.u32 %s58, 1
        %s272 = scalar_lea.sflag [#allocation3], %s271
        %s273 = sand.u32 %s58, 1
        %s274 = smul.addr %s273, 16
        %s275 = scalar_lea.vmem [#allocation2], %s274
        // Predicated region
        $region29: #{tpu_custom_call.1} parent=27 // pred_check
          %p276 = pneg %p71
        $region30: #{tpu_custom_call.1} parent=27 // pred_check_branch
          %278 = sbr.rel (%p276) target = $region32
        $region31: #{tpu_custom_call.1} parent=27 // pred_region
          %279 = dma.done %s272, 256
        $region32: #{tpu_custom_call.1} parent=27 // pred_fallthru
          _
        %s280 = sand.u32 %s90, 1
        %s281 = scalar_lea.sflag [#allocation6], %s280
        %s282 = sand.u32 %s90, 1
        %s283 = smul.addr %s282, 8
        %s284 = scalar_lea.vmem [#allocation5], %s283
        // Predicated region
        $region33: #{tpu_custom_call.1} parent=27 // pred_check
          %p285 = pneg %p103
        $region34: #{tpu_custom_call.1} parent=27 // pred_check_branch
          %287 = sbr.rel (%p285) target = $region36
        $region35: #{tpu_custom_call.1} parent=27 // pred_region
          %288 = dma.done %s281, 128
        $region36: #{tpu_custom_call.1} parent=27 // pred_fallthru
          _
        %s289 = sand.u32 %s58, 1
        %s290 = scalar_lea.sflag [#allocation3], %s289
        %s291 = sand.u32 %s58, 1
        %s292 = smul.addr %s291, 16
        %s293 = scalar_lea.vmem [#allocation2], %s292
        %p294 = pneg %p71
        %p295 = pneg %p68
        %s296 = sand.u32 %s90, 1
        %s297 = scalar_lea.sflag [#allocation6], %s296
        %s298 = sand.u32 %s90, 1
        %s299 = smul.addr %s298, 8
        %s300 = scalar_lea.vmem [#allocation5], %s299
        %p301 = pneg %p103
        %p302 = pneg %p100
        %p303 = pneg %p131
        %p304 = pneg %p128
        %s305 = sand.u32 %s118, 1
        %s306 = scalar_lea.sflag [#allocation4], %s305
        %s307 = sand.u32 %s118, 1
        %s308 = smul.addr %s307, 4
        %s309 = scalar_lea.vmem [#allocation7], %s308
        %p310 = pneg %p159
        %p311 = pneg %p156
        %p312 = scmp.lt.s32.totalorder %s30, 1
        %s313 = scalar_select %p312, %s30, 1
        %p314 = scmp.lt.s32.totalorder %s31, 1
        %s315 = scalar_select %p314, %s31, 1
        %s316 = smul.addr %s313, 2
        %s317 = sadd.s32 %s315, %s316
        %s318 = smul.addr %s317, 4
        %s319 = scalar_lea.vmem %s3, %s318
        %p320 = pneg %p187
        %p321 = pneg %p184
        %p322 = scmp.lt.s32.totalorder %s30, 1
        %s323 = scalar_select %p322, %s30, 1
        %p324 = scmp.lt.s32.totalorder %s31, 1
        %s325 = scalar_select %p324, %s31, 1
        %s326 = smul.addr %s323, 2
        %s327 = sadd.s32 %s325, %s326
        %s328 = smul.addr %s327, 2
        %s329 = scalar_lea.vmem %s4, %s328
        %s330 = smul.u32 %s31, 5
        %s331 = sadd.s32 %s330, %s32
        %s332 = smul.u32 4, %s331
        %s333 = ssub.s32 47, %s332
        %p334 = scmp.lt.s32.totalorder %s333, 4
        %s335 = scalar_select %p334, %s333, 4
        %s336 = smul.u32 64, %s335
        %s337 = smul.u32 %s31, 5
        %s338 = sadd.s32 %s337, %s32
        %s339 = smul.u32 4, %s338
        %s340 = ssub.s32 47, %s339
        %p341 = scmp.lt.s32.totalorder %s340, 4
        %s342 = scalar_select %p341, %s340, 4
        %s343 = smul.u32 32, %s342
        %p344 = scmp.lt.s32.totalorder %s30, 1
        %s345 = scalar_select %p344, %s30, 1
        %p346 = scmp.lt.s32.totalorder %s31, 1
        %s347 = scalar_select %p346, %s31, 1
        %s348 = smul.addr %s345, 2
        %s349 = sadd.s32 %s347, %s348
        %s350 = smul.addr %s349, 4
        %s351 = scalar_lea.vmem %s3, %s350
        %p352 = scmp.lt.s32.totalorder %s30, 1
        %s353 = scalar_select %p352, %s30, 1
        %p354 = scmp.lt.s32.totalorder %s31, 1
        %s355 = scalar_select %p354, %s31, 1
        %s356 = smul.addr %s353, 2
        %s357 = sadd.s32 %s355, %s356
        %s358 = smul.addr %s357, 2
        %s359 = scalar_lea.vmem %s4, %s358
        %p360 = scmp.eq.s32.totalorder %s32, 0
        // Predicated region
        $region37: #{tpu_custom_call.1} parent=27 // pred_check
          %p361 = pneg %p360
        $region38: #{tpu_custom_call.1} parent=27 // pred_check_branch
          %363 = sbr.rel (%p361) target = $region40
        $region39: #{tpu_custom_call.1} parent=27 // pred_region
          %vm364 = vcmask 27648
          %365 = vst.msk [vmem:[%s309] sm:$0xf] %vm364, 0.0
          %vm366 = vcmask 11264
          %367 = vst.msk [vmem:[%s351] sm:$0xf] %vm366, 0.0
          %vm368 = vcmask 1024
          %369 = vst.msk [vmem:[%s359] sm:$0x3] %vm368, 0.0
        $region40: #{tpu_custom_call.1} parent=27 // pred_fallthru
          _
        %v370 = vld [vmem:[%s275] sm:$0xff]
        %v371 = vld [vmem:[%s275 + $0x8] sm:$0xff]
        %v372 = vld [vmem:[%s284] sm:$0xff]
        %v373 = vld [vmem:[%s309] sm:$0xf]
        %v376 = vlaneseq
        %v377 = vshrl.u32 %v376, 7
        %v378 = vsub.s32 0, %v377
        %v379 = vrot.slane %v370, %v378
        %v380 = vlaneseq
        %v381 = vshrl.u32 %v380, 7
        %v382 = vsub.s32 4, %v381
        %v383 = vrot.slane %v370, %v382
        %v384 = vlaneseq
        %v385 = vshrl.u32 %v384, 7
        %v386 = vsub.s32 0, %v385
        %v387 = vrot.slane %v371, %v386
        %v388 = vlaneseq
        %v389 = vshrl.u32 %v388, 7
        %v390 = vsub.s32 4, %v389
        %v391 = vrot.slane %v371, %v390
        %v396 = vlaneseq
        %v397 = vshrl.u32 %v396, 7
        %v398 = vsub.s32 0, %v397
        %v399 = vrot.slane %v379, %v398
        %v400 = vlaneseq
        %v401 = vshrl.u32 %v400, 7
        %v402 = vsub.s32 0, %v401
        %v403 = vrot.slane %v383, %v402
        %v404 = vlaneseq
        %v405 = vshrl.u32 %v404, 7
        %v406 = vsub.s32 0, %v405
        %v407 = vrot.slane %v387, %v406
        %v408 = vlaneseq
        %v409 = vshrl.u32 %v408, 7
        %v410 = vsub.s32 0, %v409
        %v411 = vrot.slane %v391, %v410
        %v416 = vcombine.low %v399, %v403
        %v417 = vcombine.low %v407, %v411
        %v420 = vmul.f32 %v370, %v416
        %v421 = vmul.f32 %v371, %v417
        %v424 = vcombine.high %v420, %v420
        %v425 = vcombine.high %v421, %v421
        %vm428 = vcmask 1043456
        %v429 = vsel %vm428, %v420, 0.0
        %v430 = vsel %vm428, %v424, 0.0
        %v431 = vadd.f32 %v429, %v430
        %v432 = vsel %vm428, %v421, 0.0
        %v433 = vadd.f32 %v431, %v432
        %v434 = vsel %vm428, %v425, 0.0
        %v435 = vadd.f32 %v433, %v434
        %436 = vadd.xlane.f32.xlu0 %v435
        %v437 = vpop.xlane.xlu0 %436
        %v438 = vadd.f32 %v373, %v437
        %vm439 = vcmask 3072
        %440 = vst.msk [vmem:[%s309] sm:$0xf] %vm439, %v438
        %v441 = vld [vmem:[%s309] sm:$0xf]
        %v442 = vlaneseq
        %v443 = vshrl.u32 %v442, 7
        %v444 = vsub.s32 1, %v443
        %v445 = vrot.slane %v370, %v444
        %v446 = vlaneseq
        %v447 = vshrl.u32 %v446, 7
        %v448 = vsub.s32 5, %v447
        %v449 = vrot.slane %v370, %v448
        %v450 = vlaneseq
        %v451 = vshrl.u32 %v450, 7
        %v452 = vsub.s32 1, %v451
        %v453 = vrot.slane %v371, %v452
        %v454 = vlaneseq
        %v455 = vshrl.u32 %v454, 7
        %v456 = vsub.s32 5, %v455
        %v457 = vrot.slane %v371, %v456
        %v462 = vlaneseq
        %v463 = vshrl.u32 %v462, 7
        %v464 = vsub.s32 1, %v463
        %v465 = vrot.slane %v445, %v464
        %v466 = vlaneseq
        %v467 = vshrl.u32 %v466, 7
        %v468 = vsub.s32 1, %v467
        %v469 = vrot.slane %v449, %v468
        %v470 = vlaneseq
        %v471 = vshrl.u32 %v470, 7
        %v472 = vsub.s32 1, %v471
        %v473 = vrot.slane %v453, %v472
        %v474 = vlaneseq
        %v475 = vshrl.u32 %v474, 7
        %v476 = vsub.s32 1, %v475
        %v477 = vrot.slane %v457, %v476
        %v482 = vcombine.low %v465, %v469
        %v483 = vcombine.low %v473, %v477
        %v486 = vmul.f32 %v370, %v482
        %v487 = vmul.f32 %v371, %v483
        %v490 = vcombine.high %v486, %v486
        %v491 = vcombine.high %v487, %v487
        %v494 = vsel %vm428, %v486, 0.0
        %v495 = vsel %vm428, %v490, 0.0
        %v496 = vadd.f32 %v494, %v495
        %v497 = vsel %vm428, %v487, 0.0
        %v498 = vadd.f32 %v496, %v497
        %v499 = vsel %vm428, %v491, 0.0
        %v500 = vadd.f32 %v498, %v499
        %501 = vadd.xlane.f32.xlu0 %v500
        %v502 = vpop.xlane.xlu0 %501
        %v503 = vadd.f32 %v441, %v502
        %vm504 = vcmask 11272
        %505 = vst.msk [vmem:[%s309] sm:$0xf] %vm504, %v503
        %v506 = vld [vmem:[%s309] sm:$0xf]
        %v507 = vlaneseq
        %v508 = vshrl.u32 %v507, 7
        %v509 = vsub.s32 2, %v508
        %v510 = vrot.slane %v370, %v509
        %v511 = vlaneseq
        %v512 = vshrl.u32 %v511, 7
        %v513 = vsub.s32 6, %v512
        %v514 = vrot.slane %v370, %v513
        %v515 = vlaneseq
        %v516 = vshrl.u32 %v515, 7
        %v517 = vsub.s32 2, %v516
        %v518 = vrot.slane %v371, %v517
        %v519 = vlaneseq
        %v520 = vshrl.u32 %v519, 7
        %v521 = vsub.s32 6, %v520
        %v522 = vrot.slane %v371, %v521
        %v527 = vlaneseq
        %v528 = vshrl.u32 %v527, 7
        %v529 = vsub.s32 2, %v528
        %v530 = vrot.slane %v510, %v529
        %v531 = vlaneseq
        %v532 = vshrl.u32 %v531, 7
        %v533 = vsub.s32 2, %v532
        %v534 = vrot.slane %v514, %v533
        %v535 = vlaneseq
        %v536 = vshrl.u32 %v535, 7
        %v537 = vsub.s32 2, %v536
        %v538 = vrot.slane %v518, %v537
        %v539 = vlaneseq
        %v540 = vshrl.u32 %v539, 7
        %v541 = vsub.s32 2, %v540
        %v542 = vrot.slane %v522, %v541
        %v547 = vcombine.low %v530, %v534
        %v548 = vcombine.low %v538, %v542
        %v551 = vmul.f32 %v370, %v547
        %v552 = vmul.f32 %v371, %v548
        %v555 = vcombine.high %v551, %v551
        %v556 = vcombine.high %v552, %v552
        %v559 = vsel %vm428, %v551, 0.0
        %v560 = vsel %vm428, %v555, 0.0
        %v561 = vadd.f32 %v559, %v560
        %v562 = vsel %vm428, %v552, 0.0
        %v563 = vadd.f32 %v561, %v562
        %v564 = vsel %vm428, %v556, 0.0
        %v565 = vadd.f32 %v563, %v564
        %566 = vadd.xlane.f32.xlu0 %v565
        %v567 = vpop.xlane.xlu0 %566
        %v568 = vadd.f32 %v506, %v567
        %vm569 = vcmask 19472
        %570 = vst.msk [vmem:[%s309] sm:$0xf] %vm569, %v568
        %v571 = vld [vmem:[%s309] sm:$0xf]
        %v572 = vlaneseq
        %v573 = vshrl.u32 %v572, 7
        %v574 = vsub.s32 3, %v573
        %v575 = vrot.slane %v370, %v574
        %v576 = vlaneseq
        %v577 = vshrl.u32 %v576, 7
        %v578 = vsub.s32 7, %v577
        %v579 = vrot.slane %v370, %v578
        %v580 = vlaneseq
        %v581 = vshrl.u32 %v580, 7
        %v582 = vsub.s32 3, %v581
        %v583 = vrot.slane %v371, %v582
        %v584 = vlaneseq
        %v585 = vshrl.u32 %v584, 7
        %v586 = vsub.s32 7, %v585
        %v587 = vrot.slane %v371, %v586
        %v592 = vlaneseq
        %v593 = vshrl.u32 %v592, 7
        %v594 = vsub.s32 3, %v593
        %v595 = vrot.slane %v575, %v594
        %v596 = vlaneseq
        %v597 = vshrl.u32 %v596, 7
        %v598 = vsub.s32 3, %v597
        %v599 = vrot.slane %v579, %v598
        %v600 = vlaneseq
        %v601 = vshrl.u32 %v600, 7
        %v602 = vsub.s32 3, %v601
        %v603 = vrot.slane %v583, %v602
        %v604 = vlaneseq
        %v605 = vshrl.u32 %v604, 7
        %v606 = vsub.s32 3, %v605
        %v607 = vrot.slane %v587, %v606
        %v612 = vcombine.low %v595, %v599
        %v613 = vcombine.low %v603, %v607
        %v616 = vmul.f32 %v370, %v612
        %v617 = vmul.f32 %v371, %v613
        %v620 = vcombine.high %v616, %v616
        %v621 = vcombine.high %v617, %v617
        %v624 = vsel %vm428, %v616, 0.0
        %v625 = vsel %vm428, %v620, 0.0
        %v626 = vadd.f32 %v624, %v625
        %v627 = vsel %vm428, %v617, 0.0
        %v628 = vadd.f32 %v626, %v627
        %v629 = vsel %vm428, %v621, 0.0
        %v630 = vadd.f32 %v628, %v629
        %631 = vadd.xlane.f32.xlu0 %v630
        %v632 = vpop.xlane.xlu0 %631
        %v633 = vadd.f32 %v571, %v632
        %vm634 = vcmask 27672
        %635 = vst.msk [vmem:[%s309] sm:$0xf] %vm634, %v633
        %v636 = vld [vmem:[%s351] sm:$0xf]
        %v638 = vlaneseq
        %v639 = vshrl.u32 %v638, 7
        %v640 = vsub.s32 0, %v639
        %v641 = vrot.slane %v372, %v640
        %v642 = vlaneseq
        %v643 = vshrl.u32 %v642, 7
        %v644 = vsub.s32 2, %v643
        %v645 = vrot.slane %v372, %v644
        %v646 = vlaneseq
        %v647 = vshrl.u32 %v646, 7
        %v648 = vsub.s32 4, %v647
        %v649 = vrot.slane %v372, %v648
        %v650 = vlaneseq
        %v651 = vshrl.u32 %v650, 7
        %v652 = vsub.s32 6, %v651
        %v653 = vrot.slane %v372, %v652
        %v658 = vlaneseq
        %v659 = vshrl.u32 %v658, 7
        %v660 = vsub.s32 0, %v659
        %v661 = vrot.slane %v641, %v660
        %v662 = vlaneseq
        %v663 = vshrl.u32 %v662, 7
        %v664 = vsub.s32 0, %v663
        %v665 = vrot.slane %v645, %v664
        %v666 = vlaneseq
        %v667 = vshrl.u32 %v666, 7
        %v668 = vsub.s32 0, %v667
        %v669 = vrot.slane %v649, %v668
        %v670 = vlaneseq
        %v671 = vshrl.u32 %v670, 7
        %v672 = vsub.s32 0, %v671
        %v673 = vrot.slane %v653, %v672
        %v678 = vcombine.low %v661, %v665
        %v679 = vcombine.low %v669, %v673
        %v682 = vmul.f32 %v370, %v678
        %v683 = vmul.f32 %v371, %v679
        %v686 = vcombine.high %v682, %v682
        %v687 = vcombine.high %v683, %v683
        %v690 = vsel %vm428, %v682, 0.0
        %v691 = vsel %vm428, %v686, 0.0
        %v692 = vadd.f32 %v690, %v691
        %v693 = vsel %vm428, %v683, 0.0
        %v694 = vadd.f32 %v692, %v693
        %v695 = vsel %vm428, %v687, 0.0
        %v696 = vadd.f32 %v694, %v695
        %697 = vadd.xlane.f32.xlu0 %v696
        %v698 = vpop.xlane.xlu0 %697
        %v699 = vadd.f32 %v636, %v698
        %700 = vst.msk [vmem:[%s351] sm:$0xf] %vm439, %v699
        %v701 = vld [vmem:[%s351] sm:$0xf]
        %v702 = vlaneseq
        %v703 = vshrl.u32 %v702, 7
        %v704 = vsub.s32 1, %v703
        %v705 = vrot.slane %v372, %v704
        %v706 = vlaneseq
        %v707 = vshrl.u32 %v706, 7
        %v708 = vsub.s32 3, %v707
        %v709 = vrot.slane %v372, %v708
        %v710 = vlaneseq
        %v711 = vshrl.u32 %v710, 7
        %v712 = vsub.s32 5, %v711
        %v713 = vrot.slane %v372, %v712
        %v714 = vlaneseq
        %v715 = vshrl.u32 %v714, 7
        %v716 = vsub.s32 7, %v715
        %v717 = vrot.slane %v372, %v716
        %v722 = vlaneseq
        %v723 = vshrl.u32 %v722, 7
        %v724 = vsub.s32 1, %v723
        %v725 = vrot.slane %v705, %v724
        %v726 = vlaneseq
        %v727 = vshrl.u32 %v726, 7
        %v728 = vsub.s32 1, %v727
        %v729 = vrot.slane %v709, %v728
        %v730 = vlaneseq
        %v731 = vshrl.u32 %v730, 7
        %v732 = vsub.s32 1, %v731
        %v733 = vrot.slane %v713, %v732
        %v734 = vlaneseq
        %v735 = vshrl.u32 %v734, 7
        %v736 = vsub.s32 1, %v735
        %v737 = vrot.slane %v717, %v736
        %v742 = vcombine.low %v725, %v729
        %v743 = vcombine.low %v733, %v737
        %v746 = vmul.f32 %v370, %v742
        %v747 = vmul.f32 %v371, %v743
        %v750 = vcombine.high %v746, %v746
        %v751 = vcombine.high %v747, %v747
        %v754 = vsel %vm428, %v746, 0.0
        %v755 = vsel %vm428, %v750, 0.0
        %v756 = vadd.f32 %v754, %v755
        %v757 = vsel %vm428, %v747, 0.0
        %v758 = vadd.f32 %v756, %v757
        %v759 = vsel %vm428, %v751, 0.0
        %v760 = vadd.f32 %v758, %v759
        %761 = vadd.xlane.f32.xlu0 %v760
        %v762 = vpop.xlane.xlu0 %761
        %v763 = vadd.f32 %v701, %v762
        %764 = vst.msk [vmem:[%s351] sm:$0xf] %vm504, %v763
        %v765 = vld [vmem:[%s359] sm:$0x3]
        %v766 = vmul.f32 %v372, %v372
        %v768 = vcombine.high %v766, %v766
        %v770 = vunpack.c.l.s4 1983009808
        %v771 = vunpack.c.0.s8 %v770
        %v772 = vlaneseq
        %v773 = vshrl.u32 %v772, 7
        %v774 = vsub.s32 %v771, %v773
        %v775 = vrot.slane %v766, %v774
        %v777 = vunpack.c.l.s4 1983009808
        %v778 = vunpack.c.0.s8 %v777
        %v779 = vlaneseq
        %v780 = vshrl.u32 %v779, 7
        %v781 = vsub.s32 %v778, %v780
        %v782 = vrot.slane %v768, %v781
        %v783 = vcombine.high %v775, %v775
        %v784 = vcombine.high %v782, %v782
        %vm789 = vcmask 1041408
        %v790 = vsel %vm789, %v775, 0.0
        %v791 = vsel %vm789, %v783, 0.0
        %v792 = vadd.f32 %v790, %v791
        %v793 = vsel %vm789, %v782, 0.0
        %v794 = vadd.f32 %v792, %v793
        %v795 = vsel %vm789, %v784, 0.0
        %v796 = vadd.f32 %v794, %v795
        %797 = vadd.xlane.f32.xlu0 %v796
        %v798 = vpop.xlane.xlu0 %797
        %v799 = vadd.f32 %v765, %v798
        %vm800 = vcmask 1024
        %801 = vst.msk [vmem:[%s359] sm:$0x3] %vm800, %v799
        %s802 = sand.u32 %s118, 1
        %s803 = scalar_lea.sflag [#allocation4], %s802
        %s804 = sand.u32 %s118, 1
        %s805 = smul.addr %s804, 4
        %s806 = scalar_lea.vmem [#allocation7], %s805
        %p807 = scmp.lt.s32.totalorder %s30, 1
        %s808 = scalar_select %p807, %s30, 1
        %p809 = scmp.lt.s32.totalorder %s31, 1
        %s810 = scalar_select %p809, %s31, 1
        %s811 = smul.addr %s808, 2
        %s812 = sadd.s32 %s810, %s811
        %s813 = smul.addr %s812, 4
        %s814 = scalar_lea.vmem %s3, %s813
        %p815 = scmp.lt.s32.totalorder %s30, 1
        %s816 = scalar_select %p815, %s30, 1
        %p817 = scmp.lt.s32.totalorder %s31, 1
        %s818 = scalar_select %p817, %s31, 1
        %s819 = smul.addr %s816, 2
        %s820 = sadd.s32 %s818, %s819
        %s821 = smul.addr %s820, 2
        %s822 = scalar_lea.vmem %s4, %s821
        // Predicated region
        $region41: #{tpu_custom_call.1} parent=27 // pred_check
          %p823 = pneg %p128
        $region42: #{tpu_custom_call.1} parent=27 // pred_check_branch
          %825 = sbr.rel (%p823) target = $region44
        $region43: #{tpu_custom_call.1} parent=27 // pred_region
          %s827 = ssub.s32 64, 64
          %828 = vsyncadd %s803, %s827
          %s829 = smul.addr %s30, 2
          %s830 = sadd.s32 %s31, %s829
          %s831 = smul.addr %s830, 64
          %s832 = scalar_lea.hbm %s2, %s831
          %s834 = sshll.u32 %s806, 4
          %s835 = int_to_ptr.vmem [resolvable:$true] %s834
          %837 = dma.vmem_to_hbm [thread:$0]  %s835, 64, %s832, %s803
        $region44: #{tpu_custom_call.1} parent=27 // pred_fallthru
          _
        // Predicated region
        $region45: #{tpu_custom_call.1} parent=27 // pred_check
          %p838 = pneg %p156
        $region46: #{tpu_custom_call.1} parent=27 // pred_check_branch
          %840 = sbr.rel (%p838) target = $region48
        $region47: #{tpu_custom_call.1} parent=27 // pred_region
          _
        $region48: #{tpu_custom_call.1} parent=27 // pred_fallthru
          _
        // Predicated region
        $region49: #{tpu_custom_call.1} parent=27 // pred_check
          %p841 = pneg %p184
        $region50: #{tpu_custom_call.1} parent=27 // pred_check_branch
          %843 = sbr.rel (%p841) target = $region52
        $region51: #{tpu_custom_call.1} parent=27 // pred_region
          _
        $region52: #{tpu_custom_call.1} parent=27 // pred_fallthru
          _
      $region28: #{tpu_custom_call.1} parent=5 // pred_fallthru
        _
      %p844 = scmp.le.s32.totalorder 2, %s20
      // Predicated region
      $region53: #{tpu_custom_call.1} parent=5 // pred_check
        %p845 = pneg %p844
      $region54: #{tpu_custom_call.1} parent=5 // pred_check_branch
        %847 = sbr.rel (%p845) target = $region56
      $region55: #{tpu_custom_call.1} parent=5 // pred_region
        %s848 = ssub.s32 %s20, 2
        // Predicated region
        $region57: #{tpu_custom_call.1} parent=55 // pred_check
          %p849 = pneg %p134
        $region58: #{tpu_custom_call.1} parent=55 // pred_check_branch
          %851 = sbr.rel (%p849) target = $region60
        $region59: #{tpu_custom_call.1} parent=55 // pred_region
          %s852 = sand.u32 %s119, 1
          %s853 = scalar_lea.sflag [#allocation4], %s852
          %s854 = sand.u32 %s119, 1
          %s855 = smul.addr %s854, 4
          %s856 = scalar_lea.vmem [#allocation7], %s855
          %857 = dma.done %s853, 64
        $region60: #{tpu_custom_call.1} parent=55 // pred_fallthru
          _
        // Predicated region
        $region61: #{tpu_custom_call.1} parent=55 // pred_check
          %p858 = pneg %p162
        $region62: #{tpu_custom_call.1} parent=55 // pred_check_branch
          %860 = sbr.rel (%p858) target = $region64
        $region63: #{tpu_custom_call.1} parent=55 // pred_region
          %p861 = scmp.lt.s32.totalorder %s33, 1
          %s862 = scalar_select %p861, %s33, 1
          %p863 = scmp.lt.s32.totalorder %s34, 1
          %s864 = scalar_select %p863, %s34, 1
          %s865 = smul.addr %s862, 2
          %s866 = sadd.s32 %s864, %s865
          %s867 = smul.addr %s866, 4
          %s868 = scalar_lea.vmem %s3, %s867
        $region64: #{tpu_custom_call.1} parent=55 // pred_fallthru
          _
        // Predicated region
        $region65: #{tpu_custom_call.1} parent=55 // pred_check
          %p869 = pneg %p190
        $region66: #{tpu_custom_call.1} parent=55 // pred_check_branch
          %871 = sbr.rel (%p869) target = $region68
        $region67: #{tpu_custom_call.1} parent=55 // pred_region
          %p872 = scmp.lt.s32.totalorder %s33, 1
          %s873 = scalar_select %p872, %s33, 1
          %p874 = scmp.lt.s32.totalorder %s34, 1
          %s875 = scalar_select %p874, %s34, 1
          %s876 = smul.addr %s873, 2
          %s877 = sadd.s32 %s875, %s876
          %s878 = smul.addr %s877, 2
          %s879 = scalar_lea.vmem %s4, %s878
        $region68: #{tpu_custom_call.1} parent=55 // pred_fallthru
          _
      $region56: #{tpu_custom_call.1} parent=5 // pred_fallthru
        _
    $region6: #{tpu_custom_call.1} parent=1 // loop_footer
      %s24 = sadd.s32 1, %s20
    $region7: #{tpu_custom_call.1} parent=1 // loop_footer_branch
      %19 = sbr.rel target = $region3
    $region8: #{tpu_custom_call.1} parent=1 // loop_exit
      _
    %880 = vsyncpa [#allocation3], 1
    %s881 = scalar_lea.sflag [#allocation3], 1
    %882 = vsyncpa %s881, 1
    %883 = vsyncpa [#allocation6], 1
    %s884 = scalar_lea.sflag [#allocation6], 1
    %885 = vsyncpa %s884, 1
    %886 = vsyncpa [#allocation4], 1
    %s887 = scalar_lea.sflag [#allocation4], 1
    %888 = vsyncpa %s887, 1

</llo_original>
